<compile_context>
chip_gen: v7x
topology: tpu7x:2x2x1
jax: 0.10.0
libtpu: 0.0.40
codegen_flags: <defaults>
</compile_context>

<pallas_src>
import functools

import jax
import jax.numpy as jnp
from jax.experimental import pallas as pl
from jax.experimental.pallas import tpu as pltpu

_LANE = 128


def _round_up(x, m):
    return ((x + m - 1) // m) * m


def _cdiv(a, b):
    return (a + b - 1) // b


def _vmem_budget_bytes():
    """Per-generation usable-VMEM budget (leave headroom for the compiler)."""
    try:
        cap = pltpu.get_tpu_info().vmem_capacity_bytes
    except Exception:
        cap = 64 << 20            # conservative fallback (v7x-sized)
    # ~102 MiB on v5e/v6e (128 MiB parts), ~51 MiB on v7x (64 MiB per TC).
    return int(cap * 0.8)


def _linear_kernel(x_ref, w_ref, b_ref, o_ref, *, bf16_matmul):
    # x_ref: (TM, D)   streamed row tile
    # w_ref: (D, TN)   pre-transposed weight tile (resident if TN == Cp)
    # b_ref: (1, TN)   bias tile
    # o_ref: (TM, TN)  streamed, lane-dense output tile
    x = x_ref[...]
    w = w_ref[...]
    if bf16_matmul:
        x = x.astype(jnp.bfloat16)
        w = w.astype(jnp.bfloat16)
    # Standard (lane x sublane) contraction -> MXU, no on-chip transpose.
    acc = jnp.dot(x, w, preferred_element_type=jnp.float32)
    o_ref[...] = (acc + b_ref[...].astype(jnp.float32)).astype(o_ref.dtype)


def prepare_params(weight, bias, *, vmem_budget=None):
    """One-time parameter prep (hoist out of the per-call hot path).

    - Transposes weight to (D, C) so the kernel needs no per-step transpose.
    - Lane-pads the class dim to a multiple of 128 (unmasked vst, full MXU
      N tiles); padding is sliced off after the kernel.
    - Picks a class tile TN: whole weight resident (single-buffered) when it
      fits ~half the VMEM budget, otherwise streamed (double-buffered) class
      tiles.
    """
    C, D = weight.shape
    if vmem_budget is None:
        vmem_budget = _vmem_budget_bytes()
    itemsize = 4  # parameters kept f32 in HBM

    Cp = _round_up(max(C, _LANE), _LANE)
    if D * Cp * itemsize <= vmem_budget // 2:
        tn = Cp                                          # fully resident weight
    else:
        # Streamed class tiles: double-buffered (D, tn) blocks in ~1/4 budget.
        tn = (vmem_budget // 4) // (2 * D * itemsize)
        tn = max(_LANE, (tn // _LANE) * _LANE)
        tn = min(tn, Cp)
        Cp = _round_up(Cp, tn)

    w_t = weight.T                                       # one-time HBM transpose
    if Cp != C:
        w_t = jnp.pad(w_t, ((0, 0), (0, Cp - C)))
        b = jnp.pad(bias, (0, Cp - C))
    else:
        b = bias
    return w_t, b.reshape(1, Cp), tn


def linear_forward(x, w_t, b_row, num_classes, class_tile, *,
                   row_tile=512, bf16_matmul=False, vmem_budget=None):
    """x: (B, D); w_t: (D, Cp) pre-transposed/padded; b_row: (1, Cp)."""
    B, D = x.shape
    Dw, Cp = w_t.shape
    assert Dw == D, "weight inner dim must match x"
    tn = class_tile
    n_class_tiles = Cp // tn

    if vmem_budget is None:
        vmem_budget = _vmem_budget_bytes()
    itemsize = 4
    sublane = 16 if bf16_matmul else 8

    # Balance row tiles to minimize batch padding; encourage >=2 row tiles so
    # the "parallel" axis can feed both of v7x's TensorCores (no-op on v5e/v6e).
    n_row_tiles = max(1, _cdiv(B, row_tile))
    if n_row_tiles == 1 and n_class_tiles == 1 and B >= 2 * sublane:
        n_row_tiles = 2
    tm = _round_up(_cdiv(B, n_row_tiles), sublane)
    Bp = _round_up(B, tm)
    x_p = x if Bp == B else jnp.pad(x, ((0, Bp - B), (0, 0)))

    # VMEM budget: double-buffered x/out tiles; weight & bias single-buffered
    # when grid-invariant, double-buffered when streamed along the class axis.
    w_resident = n_class_tiles == 1
    w_bufs = 1 if w_resident else 2
    need = (2 * tm * D + 2 * tm * tn + w_bufs * (D * tn + tn)) * itemsize
    if need > vmem_budget:
        # TODO(synk): for very large D add a K grid axis ("arbitrary", last)
        # with a pl.when-guarded f32 VMEM accumulator instead of failing here.
        raise ValueError(
            f"tile footprint {need / 2**20:.1f} MiB exceeds VMEM budget "
            f"{vmem_budget / 2**20:.1f} MiB; reduce row_tile or add K tiling")
    vmem_limit = int(min(max(2 * need, 4 << 20), vmem_budget))

    if w_resident:
        # Grid-invariant blocks: single buffer (double-buffering buys nothing).
        w_spec = pl.BlockSpec((D, tn), lambda i, j: (0, j),
                              pipeline_mode=pl.Buffered(1))
        b_spec = pl.BlockSpec((1, tn), lambda i, j: (0, j),
                              pipeline_mode=pl.Buffered(1))
    else:
        w_spec = pl.BlockSpec((D, tn), lambda i, j: (0, j))
        b_spec = pl.BlockSpec((1, tn), lambda i, j: (0, j))

    kernel = functools.partial(_linear_kernel, bf16_matmul=bf16_matmul)
    out = pl.pallas_call(
        kernel,
        out_shape=jax.ShapeDtypeStruct((Bp, Cp), x.dtype),
        grid_spec=pl.GridSpec(
            grid=(Bp // tm, n_class_tiles),
            in_specs=[
                pl.BlockSpec((tm, D), lambda i, j: (i, 0)),   # x row tile
                w_spec,                                       # weight (D, TN)
                b_spec,                                       # bias   (1, TN)
            ],
            out_specs=pl.BlockSpec((tm, tn), lambda i, j: (i, j)),
        ),
        compiler_params=pltpu.CompilerParams(
            dimension_semantics=("parallel", "parallel"),
            vmem_limit_bytes=vmem_limit,
        ),
    )(x_p, w_t, b_row)

    return out[:B, :num_classes]


def logistic_regression_forward(x, weight, bias, **kwargs):
    """y = x @ weight.T + bias  (PyTorch nn.Linear forward).

    Parameter prep (transpose / pad / tile choice) is a pure function of the
    parameters; under jit it is hoisted/constant-folded. For an explicit hot
    path, call prepare_params once and reuse linear_forward.
    """
    w_t, b_row, tn = prepare_params(weight, bias)
    return linear_forward(x, w_t, b_row, weight.shape[0], tn, **kwargs)


if __name__ == "__main__":
    # Small shapes consistent with nn.Linear(input_dim, num_classes)
    batch, input_dim, num_classes = 8, 32, 10

    key = jax.random.PRNGKey(0)
    kx, kw, kb = jax.random.split(key, 3)

    x = jax.random.normal(kx, (batch, input_dim), dtype=jnp.float32)

    # Deterministic init mirroring PyTorch's nn.Linear default:
    # U(-1/sqrt(fan_in), 1/sqrt(fan_in)) for both weight and bias.
    bound = 1.0 / (input_dim ** 0.5)
    weight = jax.random.uniform(kw, (num_classes, input_dim),
                                minval=-bound, maxval=bound, dtype=jnp.float32)
    bias = jax.random.uniform(kb, (num_classes,),
                              minval=-bound, maxval=bound, dtype=jnp.float32)

    out = logistic_regression_forward(x, weight, bias)
    out = jax.block_until_ready(out)

    # Correctness check against plain JAX reference
    ref = x @ weight.T + bias
    assert out.shape == (batch, num_classes)
    assert jnp.allclose(out, ref, atol=1e-5, rtol=1e-5)

    print("KERNEL_OK")
</pallas_src>

<mosaic_0001>
module attributes {stable_mosaic.version = 11 : i64} {
  func.func @_linear_kernel(%arg0: i32, %arg1: i32, %arg2: memref<8x32xf32, #tpu.memory_space<vmem>>, %arg3: memref<32x128xf32, #tpu.memory_space<vmem>>, %arg4: memref<1x128xf32, #tpu.memory_space<vmem>>, %arg5: memref<8x128xf32, #tpu.memory_space<vmem>>) attributes {dimension_semantics = [#tpu.dimension_semantics<parallel>, #tpu.dimension_semantics<parallel>], iteration_bounds = array<i64: 1, 1>, scalar_prefetch = 0 : i64, scratch_operands = 0 : i64, tpu.core_type = #tpu.core_type<tc>, window_params = [{transform_indices = @transform_0, window_bounds = array<i64: 8, 32>}, {pipeline_mode = #tpu.pipeline_mode<synchronous>, transform_indices = @transform_1, window_bounds = array<i64: 32, 128>}, {pipeline_mode = #tpu.pipeline_mode<synchronous>, transform_indices = @transform_2, window_bounds = array<i64: 1, 128>}, {transform_indices = @transform_3, window_bounds = array<i64: 8, 128>}]} {
    %c0 = arith.constant 0 : index
    %c0_0 = arith.constant 0 : index
    %0 = vector.load %arg2[%c0, %c0_0] : memref<8x32xf32, #tpu.memory_space<vmem>>, vector<8x32xf32>
    %c0_1 = arith.constant 0 : index
    %c0_2 = arith.constant 0 : index
    %1 = vector.load %arg3[%c0_1, %c0_2] : memref<32x128xf32, #tpu.memory_space<vmem>>, vector<32x128xf32>
    %cst = arith.constant dense<0.000000e+00> : vector<8x128xf32>
    %2 = tpu.matmul %0, %1, %cst {dimension_numbers = #tpu.dot_dimension_numbers<[1], [0], [0], [1], [0, 0, 1, 1], [], []>} : vector<8x32xf32>, vector<32x128xf32>, vector<8x128xf32> -> vector<8x128xf32>
    %c0_3 = arith.constant 0 : index
    %c0_4 = arith.constant 0 : index
    %3 = vector.load %arg4[%c0_3, %c0_4] : memref<1x128xf32, #tpu.memory_space<vmem>>, vector<1x128xf32>
    %4 = vector.broadcast %3 : vector<1x128xf32> to vector<8x128xf32>
    %5 = arith.addf %2, %4 : vector<8x128xf32>
    %c0_5 = arith.constant 0 : index
    %c0_6 = arith.constant 0 : index
    %6 = vector.load %arg5[%c0_5, %c0_6] : memref<8x128xf32, #tpu.memory_space<vmem>>, vector<8x128xf32>
    tpu.vector_store %arg5[%c0_5, %c0_6], %5 {strides = array<i32>} : memref<8x128xf32, #tpu.memory_space<vmem>>, vector<8x128xf32>,
    return
  }
  func.func @transform_0(%arg0: i32, %arg1: i32) -> (i32, i32) {
    %c0_i32 = arith.constant 0 : i32
    %c0_i32_0 = arith.constant 0 : i32
    return %arg0, %c0_i32 : i32, i32
  }
  func.func @transform_1(%arg0: i32, %arg1: i32) -> (i32, i32) {
    %c0_i32 = arith.constant 0 : i32
    %c0_i32_0 = arith.constant 0 : i32
    return %c0_i32, %arg1 : i32, i32
  }
  func.func @transform_2(%arg0: i32, %arg1: i32) -> (i32, i32) {
    %c0_i32 = arith.constant 0 : i32
    %c0_i32_0 = arith.constant 0 : i32
    return %c0_i32, %arg1 : i32, i32
  }
  func.func @transform_3(%arg0: i32, %arg1: i32) -> (i32, i32) {
    %c0_i32 = arith.constant 0 : i32
    return %arg0, %arg1 : i32, i32
  }
}

</mosaic_0001>

<llo_original>
// kernel: tpu_custom_call.1
$region0: #{tpu_custom_call.1}
  #allocation0 [shape = 'u32[]', space=smem, size = 0x4, offset = 0x4, fixed_abs, tag = 'smem constant byte address 0x4 - core index']
  #allocation1 [shape = 'u32[144,128]{1,0:T(1,128)}', space=vmem, size = 0x12000, scoped, tag = 'internal scratch']
  %s0 = inlined_call_operand.hbm [shape: f32[8,32], index: 0, kind: input, shape index: {}]
  %s1 = inlined_call_operand.hbm [shape: f32[32,128], index: 1, kind: input, shape index: {}]
  %s2 = inlined_call_operand.vmem [shape: f32[1,128], index: 2, kind: input, shape index: {}]
  %s3 = inlined_call_operand.hbm [shape: f32[8,128], index: 3, kind: output, shape index: {}]
  %s4 = sld [smem:[#allocation0]]
  $region30: #{tpu_custom_call.1} parent=0
    _
  %s6 = ssub.s32 1, %s4
  %s7 = scalar_select 0, %s6, %s4
  $region1: #{tpu_custom_call.1} parent=0
    #allocation2 [shape = 'u8[4096]{0}', space=vmem, size = 0x1000, scoped, tag = 'input window, operand 0, single buffered']
    #allocation3 [shape = 's32[1]{0}', space=sflag, size = 0x4, scoped, tag = 'scoped memory for tpu_custom_call.1']
    #allocation4 [shape = 's32[1]{0}', space=sflag, size = 0x4, scoped, tag = 'scoped memory for tpu_custom_call.1']
    #allocation5 [shape = 'u8[16384]{0}', space=vmem, size = 0x4000, scoped, tag = 'input window, operand 1, single buffered']
    #allocation6 [shape = 's32[1]{0}', space=sflag, size = 0x4, scoped, tag = 'scoped memory for tpu_custom_call.1']
    #allocation7 [shape = 'u8[4096]{0}', space=vmem, size = 0x1000, scoped, tag = 'output window, operand 0, single buffered']
    %8 = vsyncpa [#allocation3], 0
    %9 = vsyncpa [#allocation6], 0
    %10 = vsyncpa [#allocation4], 0
    // Predicated region
    $region2: #{tpu_custom_call.1} parent=1 // pred_check
      _
    $region3: #{tpu_custom_call.1} parent=1 // pred_check_branch
      %12 = sbr.rel (0) target = $region5
    $region4: #{tpu_custom_call.1} parent=1 // pred_region
      %s14 = ssub.s32 128, 128
      %15 = vsyncadd [#allocation3], %s14
      %s17 = sshll.u32 [#allocation2], 4
      %s18 = int_to_ptr.vmem [resolvable:$true] %s17
      %20 = dma.hbm_to_vmem [thread:$0]  %s0, 128, %s18, [#allocation3]
    $region5: #{tpu_custom_call.1} parent=1 // pred_fallthru
      _
    // Predicated region
    $region6: #{tpu_custom_call.1} parent=1 // pred_check
      _
    $region7: #{tpu_custom_call.1} parent=1 // pred_check_branch
      %22 = sbr.rel (0) target = $region9
    $region8: #{tpu_custom_call.1} parent=1 // pred_region
      %s24 = ssub.s32 512, 512
      %25 = vsyncadd [#allocation6], %s24
      %s26 = sshll.u32 [#allocation5], 4
      %s27 = int_to_ptr.vmem [resolvable:$true] %s26
      %32 = dma.hbm_to_vmem [thread:$0]  %s1, 512, %s27, [#allocation6], 128, 128, 8
    $region9: #{tpu_custom_call.1} parent=1 // pred_fallthru
      _
    // Predicated region
    $region10: #{tpu_custom_call.1} parent=1 // pred_check
      _
    $region11: #{tpu_custom_call.1} parent=1 // pred_check_branch
      %34 = sbr.rel (0) target = $region13
    $region12: #{tpu_custom_call.1} parent=1 // pred_region
      _
    $region13: #{tpu_custom_call.1} parent=1 // pred_fallthru
      _
    // Predicated region
    $region14: #{tpu_custom_call.1} parent=1 // pred_check
      _
    $region15: #{tpu_custom_call.1} parent=1 // pred_check_branch
      %36 = sbr.rel (0) target = $region17
    $region16: #{tpu_custom_call.1} parent=1 // pred_region
      %37 = dma.done [#allocation3], 128
    $region17: #{tpu_custom_call.1} parent=1 // pred_fallthru
      _
    // Predicated region
    $region18: #{tpu_custom_call.1} parent=1 // pred_check
      _
    $region19: #{tpu_custom_call.1} parent=1 // pred_check_branch
      %39 = sbr.rel (0) target = $region21
    $region20: #{tpu_custom_call.1} parent=1 // pred_region
      %40 = dma.done [#allocation6], 512
    $region21: #{tpu_custom_call.1} parent=1 // pred_fallthru
      _
    %v41 = vld [vmem:[#allocation2] sm:$0xff]
    %v42 = vld [vmem:[#allocation5] sm:$0xff]
    %v43 = vld [vmem:[#allocation5 + $0x8] sm:$0xff]
    %v44 = vld [vmem:[#allocation5 + $0x10] sm:$0xff]
    %v45 = vld [vmem:[#allocation5 + $0x18] sm:$0xff]
    %v46 = vld [vmem:[%s2] sm:$0x1]
    %v48 = vlaneseq
    %v49 = vshrl.u32 %v48, 7
    %v50 = vsub.s32 0, %v49
    %v51 = vrot.slane %v46, %v50
    %vm53 = vcmask 261120
    %v55 = vsel %vm53, %v41, 0
    %57 = vmatprep.subr.mxu0 0.0
    %58 = vmatpush1.msra.mxu0 %v42
    %59 = vmatprep.subr.mxu0 0.0
    %60 = vmatpush1.msra.mxu0 %v43
    %61 = vmatprep.subr.mxu0 0.0
    %62 = vmatpush1.msra.mxu0 %v44
    %63 = vmatprep.subr.mxu0 0.0
    %64 = vmatpush1.msra.mxu0 %v45
    %65 = vmatprep.subr.mxu0 0.0
    %66 = vmatpush1.msra.mxu0 0.0
    %67 = vmatprep.subr.mxu0 0.0
    %68 = vmatpush1.msra.mxu0 0.0
    %69 = vmatprep.subr.mxu0 0.0
    %70 = vmatpush1.msra.mxu0 0.0
    %71 = vmatprep.subr.mxu0 0.0
    %72 = vmatpush1.msra.mxu0 0.0
    %73 = vmatprep.subr.mxu0 0.0
    %74 = vmatpush1.msra.mxu0 0.0
    %75 = vmatprep.subr.mxu0 0.0
    %76 = vmatpush1.msra.mxu0 0.0
    %77 = vmatprep.subr.mxu0 0.0
    %78 = vmatpush1.msra.mxu0 0.0
    %79 = vmatprep.subr.mxu0 0.0
    %80 = vmatpush1.msra.mxu0 0.0
    %81 = vmatprep.subr.mxu0 0.0
    %82 = vmatpush1.msra.mxu0 0.0
    %83 = vmatprep.subr.mxu0 0.0
    %84 = vmatpush1.msra.mxu0 0.0
    %85 = vmatprep.subr.mxu0 0.0
    %86 = vmatpush1.msra.mxu0 0.0
    %87 = vmatprep.subr.mxu0 0.0
    %88 = vmatpush1.msra.mxu0 0.0
    %89 = vmatprep.subr.mxu0 0.0
    %90 = vmatpush1.msra.mxu0 0.0
    %91 = vmatprep.subr.mxu0 0.0
    %92 = vmatpush1.msra.mxu0 0.0
    %93 = vmatprep.subr.mxu0 0.0
    %94 = vmatpush1.msra.mxu0 0.0
    %95 = vmatprep.subr.mxu0 0.0
    %96 = vmatpush1.msra.mxu0 0.0
    %97 = vmatprep.subr.mxu0 0.0
    %98 = vmatpush1.msra.mxu0 0.0
    %99 = vmatprep.subr.mxu0 0.0
    %100 = vmatpush1.msra.mxu0 0.0
    %101 = vmatprep.subr.mxu0 0.0
    %102 = vmatpush1.msra.mxu0 0.0
    %103 = vmatprep.subr.mxu0 0.0
    %104 = vmatpush1.msra.mxu0 0.0
    %105 = vmatprep.subr.mxu0 0.0
    %106 = vmatpush1.msra.mxu0 0.0
    %107 = vmatprep.subr.mxu0 0.0
    %108 = vmatpush1.msra.mxu0 0.0
    %109 = vmatprep.subr.mxu0 0.0
    %110 = vmatpush1.msra.mxu0 0.0
    %111 = vmatprep.subr.mxu0 0.0
    %112 = vmatpush1.msra.mxu0 0.0
    %113 = vmatprep.subr.mxu0 0.0
    %114 = vmatpush1.msra.mxu0 0.0
    %115 = vmatprep.subr.mxu0 0.0
    %116 = vmatpush1.msra.mxu0 0.0
    %117 = vmatprep.subr.mxu0 0.0
    %118 = vmatpush1.msra.mxu0 0.0
    %119 = vmatprep.subr.mxu0 0.0
    %120 = vmatpush1.msra.mxu0 0.0
    %121 = vmatprep.mubr.f32.mxu0 0.0
    %122 = vmatmul.mubr.f32.gmra.mrb[0].mxu0 %v55
    %v123 = vpop.f32.mrb[0].mxu0
    %v124 = vadd.f32 %v51, %v123
    %v125 = vpop.f32.mrb[0].mxu0
    %126 = vdwg.mxu0
    %127 = vst [vmem:[#allocation7] sm:$0xff] %v124
    // Predicated region
    $region22: #{tpu_custom_call.1} parent=1 // pred_check
      _
    $region23: #{tpu_custom_call.1} parent=1 // pred_check_branch
      %129 = sbr.rel (0) target = $region25
    $region24: #{tpu_custom_call.1} parent=1 // pred_region
      %s131 = ssub.s32 128, 128
      %132 = vsyncadd [#allocation4], %s131
      %s134 = sshll.u32 [#allocation7], 4
      %s135 = int_to_ptr.vmem [resolvable:$true] %s134
      %137 = dma.vmem_to_hbm [thread:$0]  %s135, 128, %s3, [#allocation4]
    $region25: #{tpu_custom_call.1} parent=1 // pred_fallthru
      _
    // Predicated region
    $region26: #{tpu_custom_call.1} parent=1 // pred_check
      _
    $region27: #{tpu_custom_call.1} parent=1 // pred_check_branch
      %139 = sbr.rel (0) target = $region29
    $region28: #{tpu_custom_call.1} parent=1 // pred_region
      %140 = dma.done [#allocation4], 128
    $region29: #{tpu_custom_call.1} parent=1 // pred_fallthru
      _
    %141 = vsyncpa [#allocation3], 1
    %142 = vsyncpa [#allocation6], 1
    %143 = vsyncpa [#allocation4], 1

</llo_original>
